<compile_context>
chip_gen: v5e
topology: v5e:2x2
jax: 0.10.0
libtpu: 0.0.40
codegen_flags: <defaults>
</compile_context>

<pallas_src>
import functools

import jax
import jax.numpy as jnp
from jax.experimental import pallas as pl
from jax.experimental.pallas import tpu as pltpu


def bcc_neural_dnf_kernel(x_ref, e_ref, wpi_ref, wc_ref, bias_c_ref, wd_ref,
                          bias_d_ref, out_ref, *, discretise: bool, use_bf16: bool):
    # x_ref:      (F, TB)  raw features, batch on lanes
    # e_ref:      (N, F)   0/1 expansion matrix, pre-scaled by 1/tau
    # wpi_ref:    (N, 1)   predicate thresholds, pre-scaled by 1/tau
    # wc_ref:     (C, N)   conjunction weights (bf16 if use_bf16)
    # bias_c_ref: (C, 1)   precomputed delta*(max|Wc| - sum|Wc|)
    # wd_ref:     (1, C)   disjunction weights
    # bias_d_ref: (1, 1)   precomputed delta*(sum|Wd| - max|Wd|)   [SMEM]
    # out_ref:    (1, TB)

    # Expand (F, TB) -> (N, TB) on the MXU; the P-times-repeated input never
    # exists in HBM.  The 1/tau scale rides along in e_ref.
    x_rep = jnp.dot(e_ref[...], x_ref[...],
                    preferred_element_type=jnp.float32)              # (N, TB)

    # Predicate inventor: tanh((x - threshold) / tau).  Subtraction in f32 so
    # the threshold compare is exact; cast (bf16 path) only before the tanh.
    diff = x_rep - wpi_ref[...]                                      # (N, TB)
    if use_bf16:
        diff = diff.astype(jnp.bfloat16)
    ip = jnp.tanh(diff)
    if discretise:
        # TODO(synk): jnp.sign(0) == 0; confirm this matches the PyTorch
        # discretisation convention for exact zeros.
        ip = jnp.sign(ip)

    # Conjunction semi-symbolic layer (bias precomputed in the wrapper).
    conj = jnp.tanh(jnp.dot(wc_ref[...], ip,
                            preferred_element_type=jnp.float32)
                    + bias_c_ref[...])                               # (C, TB)

    # Disjunction layer, already lane-dense: (1, C) @ (C, TB) -> (1, TB).
    disj = jnp.dot(wd_ref[...], conj,
                   preferred_element_type=jnp.float32)               # (1, TB)
    out_ref[...] = (disj + bias_d_ref[0, 0]).astype(out_ref.dtype)


def _round_up(v: int, m: int) -> int:
    return ((v + m - 1) // m) * m


def bcc_neural_dnf_forward(x, wpi, wc, wd, *, tau=1.0, delta=1.0,
                           discretise_invented_predicate=False,
                           max_tile_b=1024, use_bf16_matmul=False):
    """x: (B, F) f32; wpi: (F, P); wc: (C, F*P); wd: (1, C)  ->  (B, 1) f32.

    use_bf16_matmul: enable on v6e/v7x only (bf16 VPU/EUP/MXU); keep False on v5e.
    """
    B, F = x.shape
    F2, P = wpi.shape
    C, N = wc.shape
    assert F2 == F and N == F * P and wd.shape == (1, C)

    # Batch tile: lane dim must be a multiple of 128; ensure >= 2 grid steps
    # whenever B > 128 so both v7x TensorCores get work, and cap the tile to
    # amortise per-step pipeline overhead at large B.
    half = -(-B // 2)
    tile_b = min(int(max_tile_b), _round_up(max(half, 128), 128))
    tile_b = max(128, (tile_b // 128) * 128)
    n_tiles = pl.cdiv(B, tile_b)
    b_pad = n_tiles * tile_b

    inv_tau = 1.0 / float(tau)
    matmul_dtype = jnp.bfloat16 if use_bf16_matmul else jnp.float32

    # Batch-minor layout of the streamed input.
    # TODO(synk): this explicit transpose is one extra HBM pass in XLA; ideally
    # the producer emits x already as (F, B).
    x_t = jnp.pad(x.astype(jnp.float32), ((0, b_pad - B), (0, 0))).T   # (F, b_pad)

    # Batch-invariant operands, computed once in the wrapper (tiny, resident).
    e_t = inv_tau * jnp.repeat(jnp.eye(F, dtype=jnp.float32), P, axis=0)  # (N, F)
    wpi_col = (inv_tau * wpi.astype(jnp.float32)).reshape(N, 1)           # (N, 1)
    wc_k = wc.astype(matmul_dtype)                                        # (C, N)
    abs_wc = jnp.abs(wc).astype(jnp.float32)
    bias_c = (delta * (jnp.max(abs_wc, axis=1)
                       - jnp.sum(abs_wc, axis=1))).reshape(C, 1)          # (C, 1)
    wd_row = wd.astype(jnp.float32)                                       # (1, C)
    abs_wd = jnp.abs(wd).astype(jnp.float32)
    bias_d = (delta * (jnp.sum(abs_wd, axis=1)
                       - jnp.max(abs_wd, axis=1))).reshape(1, 1)          # (1, 1)

    kernel = functools.partial(
        bcc_neural_dnf_kernel,
        discretise=bool(discretise_invented_predicate),
        use_bf16=bool(use_bf16_matmul))

    # NOTE: resident weight operands total < 25 KiB and the per-tile working set
    # is < 1 MiB at tile_b=1024, so no vmem_limit bump is needed on any
    # generation (incl. v7x's 64 MiB VMEM).  If N/C are scaled up, consider
    # pipeline_mode=pl.Buffered(...) on the invariant operands and K-tiling.
    out_row = pl.pallas_call(
        kernel,
        out_shape=jax.ShapeDtypeStruct((1, b_pad), jnp.float32),
        grid=(n_tiles,),
        in_specs=[
            pl.BlockSpec((F, tile_b), lambda i: (0, i)),   # streamed input (batch on lanes)
            pl.BlockSpec((N, F), lambda i: (0, 0)),        # expansion matrix * 1/tau
            pl.BlockSpec((N, 1), lambda i: (0, 0)),        # predicate thresholds * 1/tau
            pl.BlockSpec((C, N), lambda i: (0, 0)),        # conjunction weights
            pl.BlockSpec((C, 1), lambda i: (0, 0)),        # precomputed conjunction bias
            pl.BlockSpec((1, C), lambda i: (0, 0)),        # disjunction weights
            pl.BlockSpec(memory_space=pltpu.MemorySpace.SMEM),  # disjunction bias scalar
        ],
        out_specs=pl.BlockSpec((1, tile_b), lambda i: (0, i)),   # lane-dense output
        compiler_params=pltpu.CompilerParams(
            dimension_semantics=("parallel",)),
    )(x_t, e_t, wpi_col, wc_k, bias_c, wd_row, bias_d)

    return out_row[0, :B][:, None]   # (B, 1)


def reference_forward(x, wpi, wc, wd, tau=1.0, delta=1.0):
    """Pure-JAX mirror of the PyTorch forward, for correctness check."""
    B, F = x.shape
    P = wpi.shape[1]
    ip = jnp.tanh((x[:, :, None] - wpi[None, :, :]) / tau).reshape(B, F * P)
    abs_wc = jnp.abs(wc)
    bias_c = jnp.max(abs_wc, axis=1) - jnp.sum(abs_wc, axis=1)
    conj = jnp.tanh(ip @ wc.T + delta * bias_c[None, :])
    abs_wd = jnp.abs(wd)
    bias_d = jnp.sum(abs_wd, axis=1) - jnp.max(abs_wd, axis=1)
    return conj @ wd.T + delta * bias_d[None, :]


if __name__ == "__main__":
    # Small shapes consistent with the module:
    #   num_features F = 16, invented_predicate_per_input P = 8 -> n_in = 128
    #   num_conjunctions C = 32, n_out = 1, batch B = 300 (non-multiple of tile).
    B, F, P, C = 300, 16, 8, 32
    tau, delta = 1.0, 1.0

    key = jax.random.PRNGKey(0)
    kx, kpi, kc, kd = jax.random.split(key, 4)
    x = jax.random.normal(kx, (B, F), dtype=jnp.float32)
    # Deterministic synthetic parameters (module __init__ defines only shapes).
    wpi = 0.5 * jax.random.normal(kpi, (F, P), dtype=jnp.float32)     # predicate_inventor
    wc = 0.1 * jax.random.normal(kc, (C, F * P), dtype=jnp.float32)   # ndnf.conjunctions.weights
    wd = 0.1 * jax.random.normal(kd, (1, C), dtype=jnp.float32)       # ndnf.disjunctions.weights

    ref = reference_forward(x, wpi, wc, wd, tau=tau, delta=delta)

    # f32 path, small tiles: B=300 -> tile_b=128, 3 grid steps, padded to 384.
    out = bcc_neural_dnf_forward(x, wpi, wc, wd, tau=tau, delta=delta,
                                 max_tile_b=128)
    out = jax.block_until_ready(out)
    assert out.shape == (B, 1)
    assert jnp.allclose(out, ref, atol=1e-3, rtol=1e-3)

    # Default tiling (tile_b chosen so both v7x cores get a step: 2 x 256 here).
    out_def = bcc_neural_dnf_forward(x, wpi, wc, wd, tau=tau, delta=delta)
    out_def = jax.block_until_ready(out_def)
    assert jnp.allclose(out_def, ref, atol=1e-3, rtol=1e-3)

    # bf16 tanh + conjunction-matmul path (v6e/v7x optimization, looser tol).
    out_bf16 = bcc_neural_dnf_forward(x, wpi, wc, wd, tau=tau, delta=delta,
                                      use_bf16_matmul=True)
    out_bf16 = jax.block_until_ready(out_bf16)
    assert jnp.allclose(out_bf16, ref, atol=5e-2, rtol=5e-2)

    # TODO(synk): get_weight_reg_loss is a training-time regulariser (not part of
    # the forward pass) and is left out of the kernel.
    print("KERNEL_OK")
</pallas_src>

<mosaic_0001>
module attributes {stable_mosaic.version = 11 : i64} {
  func.func @bcc_neural_dnf_kernel(%arg0: i32, %arg1: memref<16x128xf32, #tpu.memory_space<vmem>>, %arg2: memref<128x16xf32, #tpu.memory_space<vmem>>, %arg3: memref<128x1xf32, #tpu.memory_space<vmem>>, %arg4: memref<32x128xf32, #tpu.memory_space<vmem>>, %arg5: memref<32x1xf32, #tpu.memory_space<vmem>>, %arg6: memref<1x32xf32, #tpu.memory_space<vmem>>, %arg7: memref<1x1xf32, #tpu.memory_space<smem>>, %arg8: memref<1x128xf32, #tpu.memory_space<vmem>>) attributes {dimension_semantics = [#tpu.dimension_semantics<parallel>], iteration_bounds = array<i64: 3>, scalar_prefetch = 0 : i64, scratch_operands = 0 : i64, tpu.core_type = #tpu.core_type<tc>, window_params = [{transform_indices = @transform_0, window_bounds = array<i64: 16, 128>}, {pipeline_mode = #tpu.pipeline_mode<synchronous>, transform_indices = @transform_1, window_bounds = array<i64: 128, 16>}, {pipeline_mode = #tpu.pipeline_mode<synchronous>, transform_indices = @transform_2, window_bounds = array<i64: 128, 1>}, {pipeline_mode = #tpu.pipeline_mode<synchronous>, transform_indices = @transform_3, window_bounds = array<i64: 32, 128>}, {pipeline_mode = #tpu.pipeline_mode<synchronous>, transform_indices = @transform_4, window_bounds = array<i64: 32, 1>}, {pipeline_mode = #tpu.pipeline_mode<synchronous>, transform_indices = @transform_5, window_bounds = array<i64: 1, 32>}, {transform_indices = @transform_6, window_bounds = array<i64: 1, 1>}, {transform_indices = @transform_7, window_bounds = array<i64: 1, 128>}]} {
    %c0 = arith.constant 0 : index
    %c0_0 = arith.constant 0 : index
    %0 = vector.load %arg2[%c0, %c0_0] : memref<128x16xf32, #tpu.memory_space<vmem>>, vector<128x16xf32>
    %c0_1 = arith.constant 0 : index
    %c0_2 = arith.constant 0 : index
    %1 = vector.load %arg1[%c0_1, %c0_2] : memref<16x128xf32, #tpu.memory_space<vmem>>, vector<16x128xf32>
    %cst = arith.constant dense<0.000000e+00> : vector<128x128xf32>
    %2 = tpu.matmul %0, %1, %cst {dimension_numbers = #tpu.dot_dimension_numbers<[1], [0], [0], [1], [0, 0, 1, 1], [], []>} : vector<128x16xf32>, vector<16x128xf32>, vector<128x128xf32> -> vector<128x128xf32>
    %c0_3 = arith.constant 0 : index
    %c0_4 = arith.constant 0 : index
    %3 = vector.load %arg3[%c0_3, %c0_4] : memref<128x1xf32, #tpu.memory_space<vmem>>, vector<128x1xf32>
    %4 = vector.broadcast %3 : vector<128x1xf32> to vector<128x128xf32>
    %5 = arith.subf %2, %4 : vector<128x128xf32>
    %6 = math.tanh %5 : vector<128x128xf32>
    %c0_5 = arith.constant 0 : index
    %c0_6 = arith.constant 0 : index
    %7 = vector.load %arg4[%c0_5, %c0_6] : memref<32x128xf32, #tpu.memory_space<vmem>>, vector<32x128xf32>
    %cst_7 = arith.constant dense<0.000000e+00> : vector<32x128xf32>
    %8 = tpu.matmul %7, %6, %cst_7 {dimension_numbers = #tpu.dot_dimension_numbers<[1], [0], [0], [1], [0, 0, 1, 1], [], []>} : vector<32x128xf32>, vector<128x128xf32>, vector<32x128xf32> -> vector<32x128xf32>
    %c0_8 = arith.constant 0 : index
    %c0_9 = arith.constant 0 : index
    %9 = vector.load %arg5[%c0_8, %c0_9] : memref<32x1xf32, #tpu.memory_space<vmem>>, vector<32x1xf32>
    %10 = vector.broadcast %9 : vector<32x1xf32> to vector<32x128xf32>
    %11 = arith.addf %8, %10 : vector<32x128xf32>
    %12 = math.tanh %11 : vector<32x128xf32>
    %c0_10 = arith.constant 0 : index
    %c0_11 = arith.constant 0 : index
    %13 = vector.load %arg6[%c0_10, %c0_11] : memref<1x32xf32, #tpu.memory_space<vmem>>, vector<1x32xf32>
    %cst_12 = arith.constant dense<0.000000e+00> : vector<1x128xf32>
    %14 = tpu.matmul %13, %12, %cst_12 {dimension_numbers = #tpu.dot_dimension_numbers<[1], [0], [0], [1], [0, 0, 1, 1], [], []>} : vector<1x32xf32>, vector<32x128xf32>, vector<1x128xf32> -> vector<1x128xf32>
    %c0_13 = arith.constant 0 : index
    %c0_14 = arith.constant 0 : index
    %15 = memref.load %arg7[%c0_13, %c0_14] : memref<1x1xf32, #tpu.memory_space<smem>>
    %16 = vector.broadcast %15 : f32 to vector<1x128xf32>
    %17 = arith.addf %14, %16 : vector<1x128xf32>
    %c0_15 = arith.constant 0 : index
    %c0_16 = arith.constant 0 : index
    %18 = vector.load %arg8[%c0_15, %c0_16] : memref<1x128xf32, #tpu.memory_space<vmem>>, vector<1x128xf32>
    tpu.vector_store %arg8[%c0_15, %c0_16], %17 {strides = array<i32>} : memref<1x128xf32, #tpu.memory_space<vmem>>, vector<1x128xf32>,
    return
  }
  func.func @transform_0(%arg0: i32) -> (i32, i32) {
    %c0_i32 = arith.constant 0 : i32
    %c0_i32_0 = arith.constant 0 : i32
    return %c0_i32, %arg0 : i32, i32
  }
  func.func @transform_1(%arg0: i32) -> (i32, i32) {
    %c0_i32 = arith.constant 0 : i32
    %c0_i32_0 = arith.constant 0 : i32
    %c0_i32_1 = arith.constant 0 : i32
    return %c0_i32, %c0_i32_0 : i32, i32
  }
  func.func @transform_2(%arg0: i32) -> (i32, i32) {
    %c0_i32 = arith.constant 0 : i32
    %c0_i32_0 = arith.constant 0 : i32
    %c0_i32_1 = arith.constant 0 : i32
    return %c0_i32, %c0_i32_0 : i32, i32
  }
  func.func @transform_3(%arg0: i32) -> (i32, i32) {
    %c0_i32 = arith.constant 0 : i32
    %c0_i32_0 = arith.constant 0 : i32
    %c0_i32_1 = arith.constant 0 : i32
    return %c0_i32, %c0_i32_0 : i32, i32
  }
  func.func @transform_4(%arg0: i32) -> (i32, i32) {
    %c0_i32 = arith.constant 0 : i32
    %c0_i32_0 = arith.constant 0 : i32
    %c0_i32_1 = arith.constant 0 : i32
    return %c0_i32, %c0_i32_0 : i32, i32
  }
  func.func @transform_5(%arg0: i32) -> (i32, i32) {
    %c0_i32 = arith.constant 0 : i32
    %c0_i32_0 = arith.constant 0 : i32
    %c0_i32_1 = arith.constant 0 : i32
    return %c0_i32, %c0_i32_0 : i32, i32
  }
  func.func @transform_6(%arg0: i32) -> (i32, i32) {
    %c0_i32 = arith.constant 0 : i32
    %c0_i32_0 = arith.constant 0 : i32
    %c0_i32_1 = arith.constant 0 : i32
    return %c0_i32, %c0_i32_0 : i32, i32
  }
  func.func @transform_7(%arg0: i32) -> (i32, i32) {
    %c0_i32 = arith.constant 0 : i32
    %c0_i32_0 = arith.constant 0 : i32
    return %c0_i32, %arg0 : i32, i32
  }
}

</mosaic_0001>

<llo_original>
// kernel: tpu_custom_call.1
$region0: #{tpu_custom_call.1}
  #allocation0 [shape = 'u32[]', space=smem, size = 0x4, offset = 0x4, fixed_abs, tag = 'smem constant byte address 0x4 - core index']
  #allocation1 [shape = 'u32[72,128]{1,0:T(1,128)}', space=vmem, size = 0x9000, scoped, tag = 'internal scratch']
  #allocation2 [shape = 'f32[1,1]{1,0:T(1,128)S(6)}', space=smem, size = 0x200, scoped, tag = 'scoped memory for tpu_custom_call.1']
  %s0 = inlined_call_operand.vmem [shape: f32[16,384], index: 0, kind: input, shape index: {}]
  %s1 = inlined_call_operand.vmem [shape: f32[128,16], index: 1, kind: input, shape index: {}]
  %s2 = inlined_call_operand.vmem [shape: f32[128,1], index: 2, kind: input, shape index: {}]
  %s3 = inlined_call_operand.vmem [shape: f32[32,128], index: 3, kind: input, shape index: {}]
  %s4 = inlined_call_operand.vmem [shape: f32[32,1], index: 4, kind: input, shape index: {}]
  %s5 = inlined_call_operand.vmem [shape: f32[1,32], index: 5, kind: input, shape index: {}]
  %s6 = inlined_call_operand.<no memory space> [shape: f32[1,1], index: 6, kind: input, shape index: {}]
  %s7 = inlined_call_operand.hbm [shape: f32[1,384], index: 7, kind: output, shape index: {}]
  %s8 = sld [smem:[#allocation0]]
  $region99: #{tpu_custom_call.1} parent=0
    _
  %s10 = ssub.s32 1, %s8
  %s11 = scalar_select 0, %s10, %s8
  %12 = sst [smem:[#allocation2]] %s6
  $region1: #{tpu_custom_call.1} parent=0
    #allocation3 [shape = 'u8[16384]{0}', space=vmem, size = 0x4000, scoped, tag = 'input window, operand 0']
    #allocation4 [shape = 'u8[1024]{0}', space=vmem, size = 0x400, scoped, tag = 'output window, operand 0']
    #allocation5 [shape = 's32[2]{0}', space=sflag, size = 0x8, scoped, tag = 'scoped memory for tpu_custom_call.1']
    %13 = vsyncpa [#allocation5], 0
    %s14 = scalar_lea.sflag [#allocation5], 1
    %15 = vsyncpa %s14, 0
    loop: start=0, step=1, limit=5
    $region2: #{tpu_custom_call.1} parent=1 // loop_pre_header
      _
    $region3: #{tpu_custom_call.1} parent=1 // loop_header
      %s17 = sphi 0, %s21
      %p18 = scmp.ge.s32.totalorder %s17, 5
      %s27 = sphi 0, %s29
      %s30 = sphi 0, %s27
      %s31 = sphi 0, %s30
      %s47 = sphi 0, %s31
      %s51 = sphi 0, %s51
      %s53 = sphi 0, %s51
      %s54 = sphi 0, %s53
      %s68 = sphi 0, %s54
      %s72 = sphi 0, %s72
      %s74 = sphi 0, %s72
      %s75 = sphi 0, %s74
      %s89 = sphi 0, %s75
      %s93 = sphi 0, %s93
      %s95 = sphi 0, %s93
      %s96 = sphi 0, %s95
      %s110 = sphi 0, %s96
      %s114 = sphi 0, %s114
      %s116 = sphi 0, %s114
      %s117 = sphi 0, %s116
      %s131 = sphi 0, %s117
      %s135 = sphi 0, %s135
      %s137 = sphi 0, %s135
      %s138 = sphi 0, %s137
      %s152 = sphi 0, %s138
      %s156 = sphi 0, %s156
      %s158 = sphi 0, %s156
      %s159 = sphi 0, %s158
      %s173 = sphi 0, %s159
      %s179 = sphi 0, %s181
      %s182 = sphi 0, %s179
      %s183 = sphi 0, %s182
      %s199 = sphi 0, %s183
    $region4: #{tpu_custom_call.1} parent=1 // loop_header_branch
      %20 = sbr.rel (%p18) target = $region8
    $region5: #{tpu_custom_call.1} parent=1 // loop_body
      %s22 = ssub.s32 %s17, 1
      %s23 = ssub.s32 %s17, 2
      %s24 = sadd.s32 %s17, 1
      %s25 = ssub.s32 %s17, %s24
      %p26 = scmp.eq.s32.totalorder %s25, 0
      %s28 = sadd.s32 %s27, 1
      %s29 = scalar_select %p26, %s27, %s28
      %p32 = pneg %p26
      %p33 = scmp.eq.s32.totalorder %s17, 2
      %p34 = por %p32, %p33
      %p35 = scmp.ne.s32.totalorder %s27, %s30
      %p36 = scmp.eq.s32.totalorder %s17, 0
      %p37 = por %p35, %p36
      %p38 = scmp.ne.s32.totalorder %s27, %s30
      %p39 = scmp.eq.s32.totalorder %s22, 2
      %p40 = por %p38, %p39
      %p41 = scmp.ne.s32.totalorder %s30, %s31
      %p42 = scmp.eq.s32.totalorder %s22, 0
      %p43 = por %p41, %p42
      %p44 = scmp.ne.s32.totalorder %s30, %s31
      %p45 = scmp.eq.s32.totalorder %s23, 2
      %p46 = por %p44, %p45
      %p48 = scmp.ne.s32.totalorder %s31, %s47
      %p49 = scmp.eq.s32.totalorder %s23, 0
      %p50 = por %p48, %p49
      %s52 = sadd.s32 %s51, 1
      %p55 = scmp.eq.s32.totalorder %s17, 2
      %p56 = scmp.ne.s32.totalorder %s51, %s53
      %p57 = scmp.eq.s32.totalorder %s17, 0
      %p58 = por %p56, %p57
      %p59 = scmp.ne.s32.totalorder %s51, %s53
      %p60 = scmp.eq.s32.totalorder %s22, 2
      %p61 = por %p59, %p60
      %p62 = scmp.ne.s32.totalorder %s53, %s54
      %p63 = scmp.eq.s32.totalorder %s22, 0
      %p64 = por %p62, %p63
      %p65 = scmp.ne.s32.totalorder %s53, %s54
      %p66 = scmp.eq.s32.totalorder %s23, 2
      %p67 = por %p65, %p66
      %p69 = scmp.ne.s32.totalorder %s54, %s68
      %p70 = scmp.eq.s32.totalorder %s23, 0
      %p71 = por %p69, %p70
      %s73 = sadd.s32 %s72, 1
      %p76 = scmp.eq.s32.totalorder %s17, 2
      %p77 = scmp.ne.s32.totalorder %s72, %s74
      %p78 = scmp.eq.s32.totalorder %s17, 0
      %p79 = por %p77, %p78
      %p80 = scmp.ne.s32.totalorder %s72, %s74
      %p81 = scmp.eq.s32.totalorder %s22, 2
      %p82 = por %p80, %p81
      %p83 = scmp.ne.s32.totalorder %s74, %s75
      %p84 = scmp.eq.s32.totalorder %s22, 0
      %p85 = por %p83, %p84
      %p86 = scmp.ne.s32.totalorder %s74, %s75
      %p87 = scmp.eq.s32.totalorder %s23, 2
      %p88 = por %p86, %p87
      %p90 = scmp.ne.s32.totalorder %s75, %s89
      %p91 = scmp.eq.s32.totalorder %s23, 0
      %p92 = por %p90, %p91
      %s94 = sadd.s32 %s93, 1
      %p97 = scmp.eq.s32.totalorder %s17, 2
      %p98 = scmp.ne.s32.totalorder %s93, %s95
      %p99 = scmp.eq.s32.totalorder %s17, 0
      %p100 = por %p98, %p99
      %p101 = scmp.ne.s32.totalorder %s93, %s95
      %p102 = scmp.eq.s32.totalorder %s22, 2
      %p103 = por %p101, %p102
      %p104 = scmp.ne.s32.totalorder %s95, %s96
      %p105 = scmp.eq.s32.totalorder %s22, 0
      %p106 = por %p104, %p105
      %p107 = scmp.ne.s32.totalorder %s95, %s96
      %p108 = scmp.eq.s32.totalorder %s23, 2
      %p109 = por %p107, %p108
      %p111 = scmp.ne.s32.totalorder %s96, %s110
      %p112 = scmp.eq.s32.totalorder %s23, 0
      %p113 = por %p111, %p112
      %s115 = sadd.s32 %s114, 1
      %p118 = scmp.eq.s32.totalorder %s17, 2
      %p119 = scmp.ne.s32.totalorder %s114, %s116
      %p120 = scmp.eq.s32.totalorder %s17, 0
      %p121 = por %p119, %p120
      %p122 = scmp.ne.s32.totalorder %s114, %s116
      %p123 = scmp.eq.s32.totalorder %s22, 2
      %p124 = por %p122, %p123
      %p125 = scmp.ne.s32.totalorder %s116, %s117
      %p126 = scmp.eq.s32.totalorder %s22, 0
      %p127 = por %p125, %p126
      %p128 = scmp.ne.s32.totalorder %s116, %s117
      %p129 = scmp.eq.s32.totalorder %s23, 2
      %p130 = por %p128, %p129
      %p132 = scmp.ne.s32.totalorder %s117, %s131
      %p133 = scmp.eq.s32.totalorder %s23, 0
      %p134 = por %p132, %p133
      %s136 = sadd.s32 %s135, 1
      %p139 = scmp.eq.s32.totalorder %s17, 2
      %p140 = scmp.ne.s32.totalorder %s135, %s137
      %p141 = scmp.eq.s32.totalorder %s17, 0
      %p142 = por %p140, %p141
      %p143 = scmp.ne.s32.totalorder %s135, %s137
      %p144 = scmp.eq.s32.totalorder %s22, 2
      %p145 = por %p143, %p144
      %p146 = scmp.ne.s32.totalorder %s137, %s138
      %p147 = scmp.eq.s32.totalorder %s22, 0
      %p148 = por %p146, %p147
      %p149 = scmp.ne.s32.totalorder %s137, %s138
      %p150 = scmp.eq.s32.totalorder %s23, 2
      %p151 = por %p149, %p150
      %p153 = scmp.ne.s32.totalorder %s138, %s152
      %p154 = scmp.eq.s32.totalorder %s23, 0
      %p155 = por %p153, %p154
      %s157 = sadd.s32 %s156, 1
      %p160 = scmp.eq.s32.totalorder %s17, 2
      %p161 = scmp.ne.s32.totalorder %s156, %s158
      %p162 = scmp.eq.s32.totalorder %s17, 0
      %p163 = por %p161, %p162
      %p164 = scmp.ne.s32.totalorder %s156, %s158
      %p165 = scmp.eq.s32.totalorder %s22, 2
      %p166 = por %p164, %p165
      %p167 = scmp.ne.s32.totalorder %s158, %s159
      %p168 = scmp.eq.s32.totalorder %s22, 0
      %p169 = por %p167, %p168
      %p170 = scmp.ne.s32.totalorder %s158, %s159
      %p171 = scmp.eq.s32.totalorder %s23, 2
      %p172 = por %p170, %p171
      %p174 = scmp.ne.s32.totalorder %s159, %s173
      %p175 = scmp.eq.s32.totalorder %s23, 0
      %p176 = por %p174, %p175
      %s177 = ssub.s32 %s17, %s24
      %p178 = scmp.eq.s32.totalorder %s177, 0
      %s180 = sadd.s32 %s179, 1
      %s181 = scalar_select %p178, %s179, %s180
      %p184 = pneg %p178
      %p185 = scmp.eq.s32.totalorder %s17, 2
      %p186 = por %p184, %p185
      %p187 = scmp.ne.s32.totalorder %s179, %s182
      %p188 = scmp.eq.s32.totalorder %s17, 0
      %p189 = por %p187, %p188
      %p190 = scmp.ne.s32.totalorder %s179, %s182
      %p191 = scmp.eq.s32.totalorder %s22, 2
      %p192 = por %p190, %p191
      %p193 = scmp.ne.s32.totalorder %s182, %s183
      %p194 = scmp.eq.s32.totalorder %s22, 0
      %p195 = por %p193, %p194
      %p196 = scmp.ne.s32.totalorder %s182, %s183
      %p197 = scmp.eq.s32.totalorder %s23, 2
      %p198 = por %p196, %p197
      %p200 = scmp.ne.s32.totalorder %s183, %s199
      %p201 = scmp.eq.s32.totalorder %s23, 0
      %p202 = por %p200, %p201
      %p203 = scmp.le.s32.totalorder 1, %s17
      %p204 = scmp.lt.s32.totalorder %s17, 4
      %p205 = pnand %p203, %p204
      %p206 = pneg %p205
      // Predicated region
      $region9: #{tpu_custom_call.1} parent=5 // pred_check
        _
      $region10: #{tpu_custom_call.1} parent=5 // pred_check_branch
        %208 = sbr.rel (%p205) target = $region12
      $region11: #{tpu_custom_call.1} parent=5 // pred_region
        %s209 = ssub.s32 %s17, 1
        // Predicated region
        $region13: #{tpu_custom_call.1} parent=11 // pred_check
          %p210 = pneg %p64
        $region14: #{tpu_custom_call.1} parent=11 // pred_check_branch
          %212 = sbr.rel (%p210) target = $region16
        $region15: #{tpu_custom_call.1} parent=11 // pred_region
          _
        $region16: #{tpu_custom_call.1} parent=11 // pred_fallthru
          _
        // Predicated region
        $region17: #{tpu_custom_call.1} parent=11 // pred_check
          %p213 = pneg %p85
        $region18: #{tpu_custom_call.1} parent=11 // pred_check_branch
          %215 = sbr.rel (%p213) target = $region20
        $region19: #{tpu_custom_call.1} parent=11 // pred_region
          _
        $region20: #{tpu_custom_call.1} parent=11 // pred_fallthru
          _
        // Predicated region
        $region21: #{tpu_custom_call.1} parent=11 // pred_check
          %p216 = pneg %p106
        $region22: #{tpu_custom_call.1} parent=11 // pred_check_branch
          %218 = sbr.rel (%p216) target = $region24
        $region23: #{tpu_custom_call.1} parent=11 // pred_region
          _
        $region24: #{tpu_custom_call.1} parent=11 // pred_fallthru
          _
        // Predicated region
        $region25: #{tpu_custom_call.1} parent=11 // pred_check
          %p219 = pneg %p127
        $region26: #{tpu_custom_call.1} parent=11 // pred_check_branch
          %221 = sbr.rel (%p219) target = $region28
        $region27: #{tpu_custom_call.1} parent=11 // pred_region
          _
        $region28: #{tpu_custom_call.1} parent=11 // pred_fallthru
          _
        // Predicated region
        $region29: #{tpu_custom_call.1} parent=11 // pred_check
          %p222 = pneg %p148
        $region30: #{tpu_custom_call.1} parent=11 // pred_check_branch
          %224 = sbr.rel (%p222) target = $region32
        $region31: #{tpu_custom_call.1} parent=11 // pred_region
          _
        $region32: #{tpu_custom_call.1} parent=11 // pred_fallthru
          _
        // Predicated region
        $region33: #{tpu_custom_call.1} parent=11 // pred_check
          %p225 = pneg %p169
        $region34: #{tpu_custom_call.1} parent=11 // pred_check_branch
          %227 = sbr.rel (%p225) target = $region36
        $region35: #{tpu_custom_call.1} parent=11 // pred_region
          _
        $region36: #{tpu_custom_call.1} parent=11 // pred_fallthru
          _
      $region12: #{tpu_custom_call.1} parent=5 // pred_fallthru
        _
      %p228 = scmp.lt.s32.totalorder %s17, 3
      // Predicated region
      $region37: #{tpu_custom_call.1} parent=5 // pred_check
        %p229 = pneg %p228
      $region38: #{tpu_custom_call.1} parent=5 // pred_check_branch
        %231 = sbr.rel (%p229) target = $region40
      $region39: #{tpu_custom_call.1} parent=5 // pred_region
        // Predicated region
        $region41: #{tpu_custom_call.1} parent=39 // pred_check
          %p232 = pneg %p37
        $region42: #{tpu_custom_call.1} parent=39 // pred_check_branch
          %234 = sbr.rel (%p232) target = $region44
        $region43: #{tpu_custom_call.1} parent=39 // pred_region
          %s235 = sand.u32 %s27, 1
          %s236 = sand.u32 %s27, 1
          %s237 = smul.addr %s236, 16
          %s238 = scalar_lea.vmem [#allocation3], %s237
          %s239 = smul.addr %s17, 8
          %s240 = scalar_lea.vmem %s0, %s239
          // Predicated region
          $region45: #{tpu_custom_call.1} parent=43 // pred_check
            _
          $region46: #{tpu_custom_call.1} parent=43 // pred_check_branch
            %242 = sbr.rel (0) target = $region48
          $region47: #{tpu_custom_call.1} parent=43 // pred_region
            // Predicated region
            $region49: #{tpu_custom_call.1} parent=47 // pred_check
              _
            $region50: #{tpu_custom_call.1} parent=47 // pred_check_branch
              %244 = sbr.rel (0) target = $region52
            $region51: #{tpu_custom_call.1} parent=47 // pred_region
              // Predicated region
              $region64: #{tpu_custom_call.1} parent=51 // pred_check
                _
              $region65: #{tpu_custom_call.1} parent=51 // pred_check_branch
                %262 = sbr.rel (0) target = $region67
              $region66: #{tpu_custom_call.1} parent=51 // pred_region
                loop: start=0, step=1, limit=1
                $region68: #{tpu_custom_call.1} parent=66 // loop_pre_header
                  _
                $region69: #{tpu_custom_call.1} parent=66 // loop_header
                  %s264 = sphi 0, %s268
                  %p265 = scmp.ge.s32.totalorder %s264, 1
                  %s269 = sphi %s240, %s240
                  %s270 = sphi %s238, %s238
                $region70: #{tpu_custom_call.1} parent=66 // loop_header_branch
                  %267 = sbr.rel (%p265) target = $region74
                $region71: #{tpu_custom_call.1} parent=66 // loop_body
                  %v271 = vld [vmem:[%s269] sm:$0xff]
                  %272 = vst [vmem:[%s270] sm:$0xff] %v271
                  %v273 = vld [vmem:[%s269 + $0x18] sm:$0xff]
                  %274 = vst [vmem:[%s270 + $0x8] sm:$0xff] %v273
                $region72: #{tpu_custom_call.1} parent=66 // loop_footer
                  %s268 = sadd.s32 1, %s264
                $region73: #{tpu_custom_call.1} parent=66 // loop_footer_branch
                  %263 = sbr.rel target = $region69
                $region74: #{tpu_custom_call.1} parent=66 // loop_exit
                  _
              $region67: #{tpu_custom_call.1} parent=51 // pred_fallthru
                _
              // Predicated region
              $region75: #{tpu_custom_call.1} parent=51 // pred_check
                _
              $region76: #{tpu_custom_call.1} parent=51 // pred_check_branch
                %276 = sbr.rel target = $region78
              $region77: #{tpu_custom_call.1} parent=51 // pred_region
                _
              $region78: #{tpu_custom_call.1} parent=51 // pred_fallthru
                _
            $region52: #{tpu_custom_call.1} parent=47 // pred_fallthru
              _
            // Predicated region
            $region53: #{tpu_custom_call.1} parent=47 // pred_check
              _
            $region54: #{tpu_custom_call.1} parent=47 // pred_check_branch
              %246 = sbr.rel target = $region56
            $region55: #{tpu_custom_call.1} parent=47 // pred_region
              %s248 = ssub.s32 256, 1
              loop: start=0, step=1, limit=1
              $region57: #{tpu_custom_call.1} parent=55 // loop_pre_header
                _
              $region58: #{tpu_custom_call.1} parent=55 // loop_header
                %s250 = sphi 0, %s254
                %p251 = scmp.ge.s32.totalorder %s250, 1
                %s255 = sphi %s240, %s240
                %s256 = sphi %s238, %s238
              $region59: #{tpu_custom_call.1} parent=55 // loop_header_branch
                %253 = sbr.rel (%p251) target = $region63
              $region60: #{tpu_custom_call.1} parent=55 // loop_body
                %v257 = vld [vmem:[%s255] sm:%s248]
                %258 = vst [vmem:[%s256] sm:%s248] %v257
                %v259 = vld [vmem:[%s255 + $0x18] sm:%s248]
                %260 = vst [vmem:[%s256 + $0x8] sm:%s248] %v259
              $region61: #{tpu_custom_call.1} parent=55 // loop_footer
                %s254 = sadd.s32 1, %s250
              $region62: #{tpu_custom_call.1} parent=55 // loop_footer_branch
                %249 = sbr.rel target = $region58
              $region63: #{tpu_custom_call.1} parent=55 // loop_exit
                _
            $region56: #{tpu_custom_call.1} parent=47 // pred_fallthru
              _
          $region48: #{tpu_custom_call.1} parent=43 // pred_fallthru
            _
          %277 = vnop
        $region44: #{tpu_custom_call.1} parent=39 // pred_fallthru
          _
      $region40: #{tpu_custom_call.1} parent=5 // pred_fallthru
        _
      %p278 = scmp.le.s32.totalorder 1, %s17
      %p279 = scmp.lt.s32.totalorder %s17, 4
      %p280 = pnand %p278, %p279
      %p281 = pneg %p280
      // Predicated region
      $region79: #{tpu_custom_call.1} parent=5 // pred_check
        _
      $region80: #{tpu_custom_call.1} parent=5 // pred_check_branch
        %283 = sbr.rel (%p280) target = $region82
      $region81: #{tpu_custom_call.1} parent=5 // pred_region
        %s284 = ssub.s32 %s17, 1
        %s285 = sand.u32 %s30, 1
        %s286 = sand.u32 %s30, 1
        %s287 = smul.addr %s286, 16
        %s288 = scalar_lea.vmem [#allocation3], %s287
        // Predicated region
        $region83: #{tpu_custom_call.1} parent=81 // pred_check
          %p289 = pneg %p43
        $region84: #{tpu_custom_call.1} parent=81 // pred_check_branch
          %291 = sbr.rel (%p289) target = $region86
        $region85: #{tpu_custom_call.1} parent=81 // pred_region
          _
        $region86: #{tpu_custom_call.1} parent=81 // pred_fallthru
          _
        %s292 = sand.u32 %s30, 1
        %s293 = sand.u32 %s30, 1
        %s294 = smul.addr %s293, 16
        %s295 = scalar_lea.vmem [#allocation3], %s294
        %p296 = pneg %p43
        %p297 = pneg %p40
        %p298 = pneg %p64
        %p299 = pneg %p61
        %p300 = pneg %p85
        %p301 = pneg %p82
        %p302 = pneg %p106
        %p303 = pneg %p103
        %p304 = pneg %p127
        %p305 = pneg %p124
        %p306 = pneg %p148
        %p307 = pneg %p145
        %p308 = pneg %p169
        %p309 = pneg %p166
        %p310 = pneg %p195
        %p311 = pneg %p192
        %s312 = sand.u32 %s182, 1
        %s313 = scalar_lea.sflag [#allocation5], %s312
        %s314 = sand.u32 %s182, 1
        %s315 = scalar_lea.vmem [#allocation4], %s314
        %v316 = vld [vmem:[%s1] sm:$0xff]
        %v317 = vld [vmem:[%s1 + $0x8] sm:$0xff]
        %v318 = vld [vmem:[%s1 + $0x10] sm:$0xff]
        %v319 = vld [vmem:[%s1 + $0x18] sm:$0xff]
        %v320 = vld [vmem:[%s1 + $0x20] sm:$0xff]
        %v321 = vld [vmem:[%s1 + $0x28] sm:$0xff]
        %v322 = vld [vmem:[%s1 + $0x30] sm:$0xff]
        %v323 = vld [vmem:[%s1 + $0x38] sm:$0xff]
        %v324 = vld [vmem:[%s1 + $0x40] sm:$0xff]
        %v325 = vld [vmem:[%s1 + $0x48] sm:$0xff]
        %v326 = vld [vmem:[%s1 + $0x50] sm:$0xff]
        %v327 = vld [vmem:[%s1 + $0x58] sm:$0xff]
        %v328 = vld [vmem:[%s1 + $0x60] sm:$0xff]
        %v329 = vld [vmem:[%s1 + $0x68] sm:$0xff]
        %v330 = vld [vmem:[%s1 + $0x70] sm:$0xff]
        %v331 = vld [vmem:[%s1 + $0x78] sm:$0xff]
        %v332 = vld [vmem:[%s288] sm:$0xff]
        %v333 = vld [vmem:[%s288 + $0x8] sm:$0xff]
        %vm334 = vcmask 130048
        %v336 = vsel %vm334, %v316, 0
        %v339 = vsel %vm334, %v317, 0
        %v342 = vsel %vm334, %v318, 0
        %v345 = vsel %vm334, %v319, 0
        %v348 = vsel %vm334, %v320, 0
        %v351 = vsel %vm334, %v321, 0
        %v354 = vsel %vm334, %v322, 0
        %v357 = vsel %vm334, %v323, 0
        %v360 = vsel %vm334, %v324, 0
        %v363 = vsel %vm334, %v325, 0
        %v366 = vsel %vm334, %v326, 0
        %v369 = vsel %vm334, %v327, 0
        %v372 = vsel %vm334, %v328, 0
        %v375 = vsel %vm334, %v329, 0
        %v378 = vsel %vm334, %v330, 0
        %v381 = vsel %vm334, %v331, 0
        %383 = vmatpush.msra.mxu0 0.0
        %384 = vmatpush.msra.mxu0 0.0
        %385 = vmatpush.msra.mxu0 0.0
        %386 = vmatpush.msra.mxu0 0.0
        %387 = vmatpush.msra.mxu0 0.0
        %388 = vmatpush.msra.mxu0 0.0
        %389 = vmatpush.msra.mxu0 0.0
        %390 = vmatpush.msra.mxu0 0.0
        %391 = vmatpush.msra.mxu0 0.0
        %392 = vmatpush.msra.mxu0 0.0
        %393 = vmatpush.msra.mxu0 0.0
        %394 = vmatpush.msra.mxu0 0.0
        %395 = vmatpush.msra.mxu0 0.0
        %396 = vmatpush.msra.mxu0 0.0
        %397 = vmatpush.msra.mxu0 %v333
        %398 = vmatpush.msra.mxu0 %v332
        %399 = vmatmul.f32.gmra.mxu0 %v336
        %v400 = vpop.f32.mrf.mxu0
        %v401 = vadd.f32 0.0, %v400
        %402 = vmatmul.f32.gmra.mxu0 %v339
        %v403 = vpop.f32.mrf.mxu0
        %v404 = vadd.f32 0.0, %v403
        %405 = vmatmul.f32.gmra.mxu0 %v342
        %v406 = vpop.f32.mrf.mxu0
        %v407 = vadd.f32 0.0, %v406
        %408 = vmatmul.f32.gmra.mxu0 %v345
        %v409 = vpop.f32.mrf.mxu0
        %v410 = vadd.f32 0.0, %v409
        %411 = vmatmul.f32.gmra.mxu0 %v348
        %v412 = vpop.f32.mrf.mxu0
        %v413 = vadd.f32 0.0, %v412
        %414 = vmatmul.f32.gmra.mxu0 %v351
        %v415 = vpop.f32.mrf.mxu0
        %v416 = vadd.f32 0.0, %v415
        %417 = vmatmul.f32.gmra.mxu0 %v354
        %v418 = vpop.f32.mrf.mxu0
        %v419 = vadd.f32 0.0, %v418
        %420 = vmatmul.f32.gmra.mxu0 %v357
        %v421 = vpop.f32.mrf.mxu0
        %v422 = vadd.f32 0.0, %v421
        %423 = vmatmul.f32.gmra.mxu0 %v360
        %v424 = vpop.f32.mrf.mxu0
        %v425 = vadd.f32 0.0, %v424
        %426 = vmatmul.f32.gmra.mxu0 %v363
        %v427 = vpop.f32.mrf.mxu0
        %v428 = vadd.f32 0.0, %v427
        %429 = vmatmul.f32.gmra.mxu0 %v366
        %v430 = vpop.f32.mrf.mxu0
        %v431 = vadd.f32 0.0, %v430
        %432 = vmatmul.f32.gmra.mxu0 %v369
        %v433 = vpop.f32.mrf.mxu0
        %v434 = vadd.f32 0.0, %v433
        %435 = vmatmul.f32.gmra.mxu0 %v372
        %v436 = vpop.f32.mrf.mxu0
        %v437 = vadd.f32 0.0, %v436
        %438 = vmatmul.f32.gmra.mxu0 %v375
        %v439 = vpop.f32.mrf.mxu0
        %v440 = vadd.f32 0.0, %v439
        %441 = vmatmul.f32.gmra.mxu0 %v378
        %v442 = vpop.f32.mrf.mxu0
        %v443 = vadd.f32 0.0, %v442
        %444 = vmatmul.f32.gmra.mxu0 %v381
        %v445 = vpop.f32.mrf.mxu0
        %v446 = vadd.f32 0.0, %v445
        %447 = vdwg.mxu0
        %v448 = vld [vmem:[%s2] sm:$0xff]
        %v449 = vld [vmem:[%s2 + $0x8] sm:$0xff]
        %v450 = vld [vmem:[%s2 + $0x10] sm:$0xff]
        %v451 = vld [vmem:[%s2 + $0x18] sm:$0xff]
        %v452 = vld [vmem:[%s2 + $0x20] sm:$0xff]
        %v453 = vld [vmem:[%s2 + $0x28] sm:$0xff]
        %v454 = vld [vmem:[%s2 + $0x30] sm:$0xff]
        %v455 = vld [vmem:[%s2 + $0x38] sm:$0xff]
        %v456 = vld [vmem:[%s2 + $0x40] sm:$0xff]
        %v457 = vld [vmem:[%s2 + $0x48] sm:$0xff]
        %v458 = vld [vmem:[%s2 + $0x50] sm:$0xff]
        %v459 = vld [vmem:[%s2 + $0x58] sm:$0xff]
        %v460 = vld [vmem:[%s2 + $0x60] sm:$0xff]
        %v461 = vld [vmem:[%s2 + $0x68] sm:$0xff]
        %v462 = vld [vmem:[%s2 + $0x70] sm:$0xff]
        %v463 = vld [vmem:[%s2 + $0x78] sm:$0xff]
        %465 = vset.pattern.permute.xlu0 0
        %466 = vperm.xlu0 %465, %v448
        %v467 = vpop.permute.xlu0 %466
        %470 = vset.pattern.permute.xlu0 0
        %471 = vperm.xlu0 %470, %v449
        %v472 = vpop.permute.xlu0 %471
        %475 = vset.pattern.permute.xlu0 0
        %476 = vperm.xlu0 %475, %v450
        %v477 = vpop.permute.xlu0 %476
        %480 = vset.pattern.permute.xlu0 0
        %481 = vperm.xlu0 %480, %v451
        %v482 = vpop.permute.xlu0 %481
        %485 = vset.pattern.permute.xlu0 0
        %486 = vperm.xlu0 %485, %v452
        %v487 = vpop.permute.xlu0 %486
        %490 = vset.pattern.permute.xlu0 0
        %491 = vperm.xlu0 %490, %v453
        %v492 = vpop.permute.xlu0 %491
        %495 = vset.pattern.permute.xlu0 0
        %496 = vperm.xlu0 %495, %v454
        %v497 = vpop.permute.xlu0 %496
        %500 = vset.pattern.permute.xlu0 0
        %501 = vperm.xlu0 %500, %v455
        %v502 = vpop.permute.xlu0 %501
        %505 = vset.pattern.permute.xlu0 0
        %506 = vperm.xlu0 %505, %v456
        %v507 = vpop.permute.xlu0 %506
        %510 = vset.pattern.permute.xlu0 0
        %511 = vperm.xlu0 %510, %v457
        %v512 = vpop.permute.xlu0 %511
        %515 = vset.pattern.permute.xlu0 0
        %516 = vperm.xlu0 %515, %v458
        %v517 = vpop.permute.xlu0 %516
        %520 = vset.pattern.permute.xlu0 0
        %521 = vperm.xlu0 %520, %v459
        %v522 = vpop.permute.xlu0 %521
        %525 = vset.pattern.permute.xlu0 0
        %526 = vperm.xlu0 %525, %v460
        %v527 = vpop.permute.xlu0 %526
        %530 = vset.pattern.permute.xlu0 0
        %531 = vperm.xlu0 %530, %v461
        %v532 = vpop.permute.xlu0 %531
        %535 = vset.pattern.permute.xlu0 0
        %536 = vperm.xlu0 %535, %v462
        %v537 = vpop.permute.xlu0 %536
        %540 = vset.pattern.permute.xlu0 0
        %541 = vperm.xlu0 %540, %v463
        %v542 = vpop.permute.xlu0 %541
        %v544 = vsub.f32 %v401, %v467
        %v545 = vsub.f32 %v404, %v472
        %v546 = vsub.f32 %v407, %v477
        %v547 = vsub.f32 %v410, %v482
        %v548 = vsub.f32 %v413, %v487
        %v549 = vsub.f32 %v416, %v492
        %v550 = vsub.f32 %v419, %v497
        %v551 = vsub.f32 %v422, %v502
        %v552 = vsub.f32 %v425, %v507
        %v553 = vsub.f32 %v428, %v512
        %v554 = vsub.f32 %v431, %v517
        %v555 = vsub.f32 %v434, %v522
        %v556 = vsub.f32 %v437, %v527
        %v557 = vsub.f32 %v440, %v532
        %v558 = vsub.f32 %v443, %v537
        %v559 = vsub.f32 %v446, %v542
        %v560 = vtanh.pop %v544
        %v561 = vtanh.pop %v545
        %v562 = vtanh.pop %v546
        %v563 = vtanh.pop %v547
        %v564 = vtanh.pop %v548
        %v565 = vtanh.pop %v549
        %v566 = vtanh.pop %v550
        %v567 = vtanh.pop %v551
        %v568 = vtanh.pop %v552
        %v569 = vtanh.pop %v553
        %v570 = vtanh.pop %v554
        %v571 = vtanh.pop %v555
        %v572 = vtanh.pop %v556
        %v573 = vtanh.pop %v557
        %v574 = vtanh.pop %v558
        %v575 = vtanh.pop %v559
        %v576 = vld [vmem:[%s3] sm:$0xff]
        %v577 = vld [vmem:[%s3 + $0x8] sm:$0xff]
        %v578 = vld [vmem:[%s3 + $0x10] sm:$0xff]
        %v579 = vld [vmem:[%s3 + $0x18] sm:$0xff]
        %v580 = vld [vmem:[%s4] sm:$0xff]
        %v581 = vld [vmem:[%s4 + $0x8] sm:$0xff]
        %v582 = vld [vmem:[%s4 + $0x10] sm:$0xff]
        %v583 = vld [vmem:[%s4 + $0x18] sm:$0xff]
        %585 = vset.pattern.permute.xlu0 0
        %586 = vperm.xlu0 %585, %v580
        %v587 = vpop.permute.xlu0 %586
        %590 = vset.pattern.permute.xlu0 0
        %591 = vperm.xlu0 %590, %v581
        %v592 = vpop.permute.xlu0 %591
        %595 = vset.pattern.permute.xlu0 0
        %596 = vperm.xlu0 %595, %v582
        %v597 = vpop.permute.xlu0 %596
        %600 = vset.pattern.permute.xlu0 0
        %601 = vperm.xlu0 %600, %v583
        %v602 = vpop.permute.xlu0 %601
        %604 = vmatpush.msra.mxu0 %v575
        %605 = vmatpush.msra.mxu0 %v574
        %606 = vmatpush.msra.mxu0 %v573
        %607 = vmatpush.msra.mxu0 %v572
        %608 = vmatpush.msra.mxu0 %v571
        %609 = vmatpush.msra.mxu0 %v570
        %610 = vmatpush.msra.mxu0 %v569
        %611 = vmatpush.msra.mxu0 %v568
        %612 = vmatpush.msra.mxu0 %v567
        %613 = vmatpush.msra.mxu0 %v566
        %614 = vmatpush.msra.mxu0 %v565
        %615 = vmatpush.msra.mxu0 %v564
        %616 = vmatpush.msra.mxu0 %v563
        %617 = vmatpush.msra.mxu0 %v562
        %618 = vmatpush.msra.mxu0 %v561
        %619 = vmatpush.msra.mxu0 %v560
        %620 = vmatmul.f32.gmra.mxu0 %v576
        %v621 = vpop.f32.mrf.mxu0
        %v622 = vadd.f32 %v587, %v621
        %623 = vmatmul.f32.gmra.mxu0 %v577
        %v624 = vpop.f32.mrf.mxu0
        %v625 = vadd.f32 %v592, %v624
        %626 = vmatmul.f32.gmra.mxu0 %v578
        %v627 = vpop.f32.mrf.mxu0
        %v628 = vadd.f32 %v597, %v627
        %629 = vmatmul.f32.gmra.mxu0 %v579
        %v630 = vpop.f32.mrf.mxu0
        %v631 = vadd.f32 %v602, %v630
        %632 = vdwg.mxu0
        %v633 = vtanh.pop %v622
        %v634 = vtanh.pop %v625
        %v635 = vtanh.pop %v628
        %v636 = vtanh.pop %v631
        %v637 = vld [vmem:[%s5] sm:$0x1]
        %s638 = sld [smem:[#allocation2]]
        %v639 = vstv %s638
        %vm640 = vcmask 261120
        %v642 = vsel %vm640, %v637, 0
        %644 = vmatpush.msra.mxu0 0.0
        %645 = vmatpush.msra.mxu0 0.0
        %646 = vmatpush.msra.mxu0 0.0
        %647 = vmatpush.msra.mxu0 0.0
        %648 = vmatpush.msra.mxu0 0.0
        %649 = vmatpush.msra.mxu0 0.0
        %650 = vmatpush.msra.mxu0 0.0
        %651 = vmatpush.msra.mxu0 0.0
        %652 = vmatpush.msra.mxu0 0.0
        %653 = vmatpush.msra.mxu0 0.0
        %654 = vmatpush.msra.mxu0 0.0
        %655 = vmatpush.msra.mxu0 0.0
        %656 = vmatpush.msra.mxu0 %v636
        %657 = vmatpush.msra.mxu0 %v635
        %658 = vmatpush.msra.mxu0 %v634
        %659 = vmatpush.msra.mxu0 %v633
        %660 = vmatmul.f32.gmra.mxu0 %v642
        %v661 = vpop.f32.mrf.mxu0
        %v662 = vadd.f32 %v639, %v661
        %663 = vdwg.mxu0
        %664 = vst [vmem:[%s315] sm:$0x1] %v662
        %s665 = sand.u32 %s182, 1
        %s666 = scalar_lea.sflag [#allocation5], %s665
        %s667 = sand.u32 %s182, 1
        %s668 = scalar_lea.vmem [#allocation4], %s667
        // Predicated region
        $region87: #{tpu_custom_call.1} parent=81 // pred_check
          %p669 = pneg %p192
        $region88: #{tpu_custom_call.1} parent=81 // pred_check_branch
          %671 = sbr.rel (%p669) target = $region90
        $region89: #{tpu_custom_call.1} parent=81 // pred_region
          %673 = vsyncadd %s666, 0
          %s674 = scalar_lea.hbm %s7, %s22
          %s676 = sshll.u32 %s668, 4
          %s677 = int_to_ptr.vmem [resolvable:$true] %s676
          %s678 = sshll.u32 %s674, 4
          %s679 = int_to_ptr.hbm [resolvable:$true] %s678
          %681 = dma.vmem_to_hbm [thread:$0]  %s677, 16, %s679, %s666
        $region90: #{tpu_custom_call.1} parent=81 // pred_fallthru
          _
      $region82: #{tpu_custom_call.1} parent=5 // pred_fallthru
        _
      %p682 = scmp.le.s32.totalorder 2, %s17
      // Predicated region
      $region91: #{tpu_custom_call.1} parent=5 // pred_check
        %p683 = pneg %p682
      $region92: #{tpu_custom_call.1} parent=5 // pred_check_branch
        %685 = sbr.rel (%p683) target = $region94
      $region93: #{tpu_custom_call.1} parent=5 // pred_region
        %s686 = ssub.s32 %s17, 2
        // Predicated region
        $region95: #{tpu_custom_call.1} parent=93 // pred_check
          %p687 = pneg %p198
        $region96: #{tpu_custom_call.1} parent=93 // pred_check_branch
          %689 = sbr.rel (%p687) target = $region98
        $region97: #{tpu_custom_call.1} parent=93 // pred_region
          %s690 = sand.u32 %s183, 1
          %s691 = scalar_lea.sflag [#allocation5], %s690
          %s692 = sand.u32 %s183, 1
          %s693 = scalar_lea.vmem [#allocation4], %s692
          %695 = dma.done %s691, 16
        $region98: #{tpu_custom_call.1} parent=93 // pred_fallthru
          _
      $region94: #{tpu_custom_call.1} parent=5 // pred_fallthru
        _
    $region6: #{tpu_custom_call.1} parent=1 // loop_footer
      %s21 = sadd.s32 1, %s17
    $region7: #{tpu_custom_call.1} parent=1 // loop_footer_branch
      %16 = sbr.rel target = $region3
    $region8: #{tpu_custom_call.1} parent=1 // loop_exit
      _
    %696 = vsyncpa [#allocation5], 1
    %s697 = scalar_lea.sflag [#allocation5], 1
    %698 = vsyncpa %s697, 1

</llo_original>
